<compile_context>
chip_gen: v7x
topology: tpu7x:2x2x1
jax: 0.10.0
libtpu: 0.0.40
codegen_flags: <defaults>
</compile_context>

<pallas_src>
import math

import jax
import jax.numpy as jnp
import numpy as np
from jax.experimental import pallas as pl
from jax.experimental.pallas import tpu as pltpu

# ---- problem sizes (small, deterministic) ----
B = 2            # batch
S = 8            # sequence length
D = 32           # hidden_dim
H = 4            # num_heads
HD = D // H      # head_dim
MLP = 64         # mlp_dim
BS = B * S       # fused batch*seq rows
R = H * BS       # head-stacked rows for attention
EPS = 1e-6
NEG_BIG = -1e30  # "minus infinity" for masked (cross-batch) score entries
LANES = 128      # slab lane width

# ---- packed-slab row offsets (all multiples of 8) ----
ROW_HEAD_MASK = 0                    # (R, D)   0/1 head-lane mask
ROW_SCORE_BIAS = ROW_HEAD_MASK + R   # (R, BS)  0 / NEG_BIG additive score bias
ROW_WQ = ROW_SCORE_BIAS + R          # (D, D)   scale pre-folded
ROW_WK = ROW_WQ + D                  # (D, D)
ROW_WV = ROW_WK + D                  # (D, D)
ROW_WO = ROW_WV + D                  # (D, D)
ROW_W1 = ROW_WO + D                  # (D, MLP)
ROW_W2 = ROW_W1 + D                  # (MLP, D)
ROW_LN1W = ROW_W2 + MLP              # vectors below are pre-broadcast to (BS, .)
ROW_LN1B = ROW_LN1W + BS
ROW_LN2W = ROW_LN1B + BS
ROW_LN2B = ROW_LN2W + BS
ROW_BQ = ROW_LN2B + BS               # scale pre-folded
ROW_BV = ROW_BQ + BS
ROW_BO = ROW_BV + BS
ROW_B2 = ROW_BO + BS
ROW_B1 = ROW_B2 + BS                 # (BS, MLP)
N_ROWS = ROW_B1 + BS                 # = 496


def _layernorm(x, w, b):
    # x, w, b: (N, D); LayerNorm over last dim, eps=1e-6, biased variance.
    mu = jnp.mean(x, axis=-1, keepdims=True)
    xc = x - mu
    var = jnp.mean(xc * xc, axis=-1, keepdims=True)
    return xc * jax.lax.rsqrt(var + EPS) * w + b


def _gelu_exact(x):
    # PyTorch nn.GELU() default = exact (erf) formulation.
    return 0.5 * x * (1.0 + jax.lax.erf(x * (1.0 / math.sqrt(2.0))))


def encoder_block_kernel(x_ref, slab_ref, o_ref):
    x_in = x_ref[...]                                                   # (BS, D)

    # ---- static views into the single packed parameter slab ----
    head_mask = slab_ref[ROW_HEAD_MASK:ROW_HEAD_MASK + R, 0:D]          # (R, D)
    score_bias = slab_ref[ROW_SCORE_BIAS:ROW_SCORE_BIAS + R, 0:BS]      # (R, BS)
    wq = slab_ref[ROW_WQ:ROW_WQ + D, 0:D]
    wk = slab_ref[ROW_WK:ROW_WK + D, 0:D]
    wv = slab_ref[ROW_WV:ROW_WV + D, 0:D]
    wo = slab_ref[ROW_WO:ROW_WO + D, 0:D]
    w1 = slab_ref[ROW_W1:ROW_W1 + D, 0:MLP]
    w2 = slab_ref[ROW_W2:ROW_W2 + MLP, 0:D]
    ln1_w = slab_ref[ROW_LN1W:ROW_LN1W + BS, 0:D]                        # pre-broadcast
    ln1_b = slab_ref[ROW_LN1B:ROW_LN1B + BS, 0:D]
    ln2_w = slab_ref[ROW_LN2W:ROW_LN2W + BS, 0:D]
    ln2_b = slab_ref[ROW_LN2B:ROW_LN2B + BS, 0:D]
    bq = slab_ref[ROW_BQ:ROW_BQ + BS, 0:D]
    bv = slab_ref[ROW_BV:ROW_BV + BS, 0:D]
    bo = slab_ref[ROW_BO:ROW_BO + BS, 0:D]
    b2 = slab_ref[ROW_B2:ROW_B2 + BS, 0:D]
    b1 = slab_ref[ROW_B1:ROW_B1 + BS, 0:MLP]

    # ---- ln_1 ----
    xn = _layernorm(x_in, ln1_w, ln1_b)                                  # (BS, D)

    # ---- QKV projections (scale folded into wq/bq; bk dropped: softmax-invariant) ----
    q = jnp.dot(xn, wq, preferred_element_type=jnp.float32) + bq
    k = jnp.dot(xn, wk, preferred_element_type=jnp.float32)
    v = jnp.dot(xn, wv, preferred_element_type=jnp.float32) + bv

    # ---- multi-head attention via head-stacked rows + precomputed masks (2 matmuls) ----
    q_stack = head_mask * jnp.concatenate([q] * H, axis=0)               # (R, D)
    # scores[r, j] = <q_head(r)[row(r)], k[j]> : contract both last dims (no k transpose)
    scores = jax.lax.dot_general(
        q_stack, k, dimension_numbers=(((1,), (1,)), ((), ())),
        preferred_element_type=jnp.float32)                              # (R, BS)
    scores = scores + score_bias                                         # block-diag batch mask
    scores = scores - jnp.max(scores, axis=-1, keepdims=True)
    e = jnp.exp(scores)
    inv_den = pl.reciprocal(jnp.sum(e, axis=-1, keepdims=True), approx=False)
    p = e * inv_den                                                      # (R, BS)

    ctx = jnp.dot(p, v, preferred_element_type=jnp.float32) * head_mask  # (R, D)
    # recombine heads: attn[i, l] = ctx[head(l)*BS + i, l] (masked adds, no lane concat)
    attn = ctx[0:BS]
    for h in range(1, H):
        attn = attn + ctx[h * BS:(h + 1) * BS]                           # (BS, D)
    attn = jnp.dot(attn, wo, preferred_element_type=jnp.float32) + bo

    # dropout (eval) = identity; residual
    x1 = attn + x_in                                                     # (BS, D)

    # ---- ln_2 + MLP ----
    yn = _layernorm(x1, ln2_w, ln2_b)
    hdn = _gelu_exact(jnp.dot(yn, w1, preferred_element_type=jnp.float32) + b1)
    y = jnp.dot(hdn, w2, preferred_element_type=jnp.float32) + b2

    o_ref[...] = (x1 + y).astype(o_ref.dtype)


def encoder_block(x, slab):
    """x: (B, S, D) float32, slab: (N_ROWS, 128) packed params. Single gridless pallas_call."""
    Bsz, Ssz, Dsz = x.shape
    x2d = x.reshape(Bsz * Ssz, Dsz)
    vmem = pl.BlockSpec(memory_space=pltpu.MemorySpace.VMEM)
    out2d = pl.pallas_call(
        encoder_block_kernel,
        out_shape=jax.ShapeDtypeStruct((Bsz * Ssz, Dsz), x.dtype),
        in_specs=[vmem, vmem],
        out_specs=vmem,
    )(x2d, slab)
    return out2d.reshape(Bsz, Ssz, Dsz)


def make_raw_params(key):
    """Deterministic synthetic params (PyTorch layout: nn.MultiheadAttention + MLPBlock)."""
    ks = jax.random.split(key, 8)

    def xavier(k, fan_in, fan_out, shape):
        lim = math.sqrt(6.0 / (fan_in + fan_out))
        return jax.random.uniform(k, shape, jnp.float32, -lim, lim)

    return {
        "ln1_w": jnp.ones((D,), jnp.float32),
        "ln1_b": jnp.zeros((D,), jnp.float32),
        "ln2_w": jnp.ones((D,), jnp.float32),
        "ln2_b": jnp.zeros((D,), jnp.float32),
        "in_proj_w": xavier(ks[0], D, 3 * D, (3 * D, D)),
        "in_proj_b": 1e-3 * jax.random.normal(ks[1], (3 * D,), jnp.float32),
        "out_proj_w": xavier(ks[2], D, D, (D, D)),
        "out_proj_b": 1e-3 * jax.random.normal(ks[3], (D,), jnp.float32),
        "w1": xavier(ks[4], D, MLP, (MLP, D)),
        "b1": 1e-6 * jax.random.normal(ks[5], (MLP,), jnp.float32),
        "w2": xavier(ks[6], MLP, D, (D, MLP)),
        "b2": 1e-6 * jax.random.normal(ks[7], (D,), jnp.float32),
    }


def pack_params(raw):
    """Pack all weights, pre-broadcast biases/LN vectors, and constant masks into ONE slab."""
    scale = 1.0 / math.sqrt(HD)
    in_w = np.asarray(raw["in_proj_w"], np.float32)
    in_b = np.asarray(raw["in_proj_b"], np.float32)
    wq = in_w[0:D].T * scale              # fold attention scale into wq
    wk = in_w[D:2 * D].T
    wv = in_w[2 * D:3 * D].T
    bq = in_b[0:D] * scale                # fold attention scale into bq
    bv = in_b[2 * D:3 * D]                # bk intentionally dropped (softmax-invariant)
    wo = np.asarray(raw["out_proj_w"], np.float32).T
    bo = np.asarray(raw["out_proj_b"], np.float32)
    w1 = np.asarray(raw["w1"], np.float32).T       # (D, MLP)
    b1 = np.asarray(raw["b1"], np.float32)
    w2 = np.asarray(raw["w2"], np.float32).T       # (MLP, D)
    b2 = np.asarray(raw["b2"], np.float32)

    # constant masks, hoisted out of the kernel
    row_head = np.arange(R)[:, None] // BS
    lane_head = np.arange(D)[None, :] // HD
    head_mask = (row_head == lane_head).astype(np.float32)              # (R, D)
    q_batch = (np.arange(R)[:, None] % BS) // S
    k_batch = np.arange(BS)[None, :] // S
    score_bias = np.where(q_batch == k_batch, 0.0, NEG_BIG).astype(np.float32)  # (R, BS)

    slab = np.zeros((N_ROWS, LANES), np.float32)

    def put(row, a):
        a = np.asarray(a, np.float32)
        slab[row:row + a.shape[0], :a.shape[1]] = a

    def put_bcast(row, vec):
        v = np.asarray(vec, np.float32).reshape(1, -1)
        slab[row:row + BS, :v.shape[1]] = np.broadcast_to(v, (BS, v.shape[1]))

    put(ROW_HEAD_MASK, head_mask)
    put(ROW_SCORE_BIAS, score_bias)
    put(ROW_WQ, wq)
    put(ROW_WK, wk)
    put(ROW_WV, wv)
    put(ROW_WO, wo)
    put(ROW_W1, w1)
    put(ROW_W2, w2)
    put_bcast(ROW_LN1W, raw["ln1_w"])
    put_bcast(ROW_LN1B, raw["ln1_b"])
    put_bcast(ROW_LN2W, raw["ln2_w"])
    put_bcast(ROW_LN2B, raw["ln2_b"])
    put_bcast(ROW_BQ, bq)
    put_bcast(ROW_BV, bv)
    put_bcast(ROW_BO, bo)
    put_bcast(ROW_B2, b2)
    put_bcast(ROW_B1, b1)
    return jnp.asarray(slab)


def reference(x, raw):
    """Pure-JAX reference of the PyTorch EncoderBlock forward (eval mode), raw weights,
    including the bk bias the kernel omits (to prove it does not change the output)."""
    def ln(v, w, b):
        mu = jnp.mean(v, -1, keepdims=True)
        var = jnp.mean((v - mu) ** 2, -1, keepdims=True)
        return (v - mu) / jnp.sqrt(var + EPS) * w + b

    xn = ln(x, raw["ln1_w"], raw["ln1_b"])
    wq, wk, wv = (raw["in_proj_w"][0:D], raw["in_proj_w"][D:2 * D],
                  raw["in_proj_w"][2 * D:3 * D])
    bq, bk, bv = (raw["in_proj_b"][0:D], raw["in_proj_b"][D:2 * D],
                  raw["in_proj_b"][2 * D:3 * D])
    q = xn @ wq.T + bq
    k = xn @ wk.T + bk
    v = xn @ wv.T + bv

    def heads(t):  # (B,S,D) -> (B,H,S,HD)
        return t.reshape(x.shape[0], S, H, HD).transpose(0, 2, 1, 3)

    qh, kh, vh = heads(q), heads(k), heads(v)
    sc = jnp.einsum("bhsd,bhtd->bhst", qh, kh) / math.sqrt(HD)
    pr = jax.nn.softmax(sc, axis=-1)
    at = jnp.einsum("bhst,bhtd->bhsd", pr, vh).transpose(0, 2, 1, 3).reshape(x.shape[0], S, D)
    at = at @ raw["out_proj_w"].T + raw["out_proj_b"]
    x1 = at + x
    yn = ln(x1, raw["ln2_w"], raw["ln2_b"])
    hdn = yn @ raw["w1"].T + raw["b1"]
    hdn = 0.5 * hdn * (1.0 + jax.lax.erf(hdn / math.sqrt(2.0)))
    y = hdn @ raw["w2"].T + raw["b2"]
    return x1 + y


if __name__ == "__main__":
    key = jax.random.PRNGKey(0)
    kx, kp = jax.random.split(key)
    x = jax.random.normal(kx, (B, S, D), jnp.float32)
    raw = make_raw_params(kp)
    slab = pack_params(raw)

    out = jax.block_until_ready(encoder_block(x, slab))

    ref = reference(x, raw)
    np.testing.assert_allclose(np.asarray(out), np.asarray(ref), rtol=1e-4, atol=1e-4)

    print("KERNEL_OK")
</pallas_src>

<mosaic_0001>
module attributes {stable_mosaic.version = 11 : i64} {
  func.func @encoder_block_kernel(%arg0: memref<16x32xf32, #tpu.memory_space<vmem>>, %arg1: memref<496x128xf32, #tpu.memory_space<vmem>>, %arg2: memref<16x32xf32, #tpu.memory_space<vmem>>) attributes {dimension_semantics = [], scalar_prefetch = 0 : i64, scratch_operands = 0 : i64, tpu.core_type = #tpu.core_type<tc>} {
    %c0 = arith.constant 0 : index
    %c0_0 = arith.constant 0 : index
    %0 = vector.load %arg0[%c0, %c0_0] : memref<16x32xf32, #tpu.memory_space<vmem>>, vector<16x32xf32>
    %c0_1 = arith.constant 0 : index
    %c0_2 = arith.constant 0 : index
    %1 = vector.load %arg1[%c0_1, %c0_2] : memref<496x128xf32, #tpu.memory_space<vmem>>, vector<64x32xf32>
    %c64 = arith.constant 64 : index
    %c0_3 = arith.constant 0 : index
    %2 = vector.load %arg1[%c64, %c0_3] : memref<496x128xf32, #tpu.memory_space<vmem>>, vector<64x16xf32>
    %c128 = arith.constant 128 : index
    %c0_4 = arith.constant 0 : index
    %3 = vector.load %arg1[%c128, %c0_4] : memref<496x128xf32, #tpu.memory_space<vmem>>, vector<32x32xf32>
    %c160 = arith.constant 160 : index
    %c0_5 = arith.constant 0 : index
    %4 = vector.load %arg1[%c160, %c0_5] : memref<496x128xf32, #tpu.memory_space<vmem>>, vector<32x32xf32>
    %c192 = arith.constant 192 : index
    %c0_6 = arith.constant 0 : index
    %5 = vector.load %arg1[%c192, %c0_6] : memref<496x128xf32, #tpu.memory_space<vmem>>, vector<32x32xf32>
    %c224 = arith.constant 224 : index
    %c0_7 = arith.constant 0 : index
    %6 = vector.load %arg1[%c224, %c0_7] : memref<496x128xf32, #tpu.memory_space<vmem>>, vector<32x32xf32>
    %c256 = arith.constant 256 : index
    %c0_8 = arith.constant 0 : index
    %7 = vector.load %arg1[%c256, %c0_8] : memref<496x128xf32, #tpu.memory_space<vmem>>, vector<32x64xf32>
    %c288 = arith.constant 288 : index
    %c0_9 = arith.constant 0 : index
    %8 = vector.load %arg1[%c288, %c0_9] : memref<496x128xf32, #tpu.memory_space<vmem>>, vector<64x32xf32>
    %c352 = arith.constant 352 : index
    %c0_10 = arith.constant 0 : index
    %9 = vector.load %arg1[%c352, %c0_10] : memref<496x128xf32, #tpu.memory_space<vmem>>, vector<16x32xf32>
    %c368 = arith.constant 368 : index
    %c0_11 = arith.constant 0 : index
    %10 = vector.load %arg1[%c368, %c0_11] : memref<496x128xf32, #tpu.memory_space<vmem>>, vector<16x32xf32>
    %c384 = arith.constant 384 : index
    %c0_12 = arith.constant 0 : index
    %11 = vector.load %arg1[%c384, %c0_12] : memref<496x128xf32, #tpu.memory_space<vmem>>, vector<16x32xf32>
    %c400 = arith.constant 400 : index
    %c0_13 = arith.constant 0 : index
    %12 = vector.load %arg1[%c400, %c0_13] : memref<496x128xf32, #tpu.memory_space<vmem>>, vector<16x32xf32>
    %c416 = arith.constant 416 : index
    %c0_14 = arith.constant 0 : index
    %13 = vector.load %arg1[%c416, %c0_14] : memref<496x128xf32, #tpu.memory_space<vmem>>, vector<16x32xf32>
    %c432 = arith.constant 432 : index
    %c0_15 = arith.constant 0 : index
    %14 = vector.load %arg1[%c432, %c0_15] : memref<496x128xf32, #tpu.memory_space<vmem>>, vector<16x32xf32>
    %c448 = arith.constant 448 : index
    %c0_16 = arith.constant 0 : index
    %15 = vector.load %arg1[%c448, %c0_16] : memref<496x128xf32, #tpu.memory_space<vmem>>, vector<16x32xf32>
    %c464 = arith.constant 464 : index
    %c0_17 = arith.constant 0 : index
    %16 = vector.load %arg1[%c464, %c0_17] : memref<496x128xf32, #tpu.memory_space<vmem>>, vector<16x32xf32>
    %c480 = arith.constant 480 : index
    %c0_18 = arith.constant 0 : index
    %17 = vector.load %arg1[%c480, %c0_18] : memref<496x128xf32, #tpu.memory_space<vmem>>, vector<16x64xf32>
    %cst = arith.constant dense<0.000000e+00> : vector<16xf32>
    %18 = vector.multi_reduction <add>, %0, %cst [1] : vector<16x32xf32> to vector<16xf32>
    %19 = vector.shape_cast %18 : vector<16xf32> to vector<16x1xf32>
    %cst_19 = arith.constant 3.200000e+01 : f32
    %20 = vector.broadcast %cst_19 : f32 to vector<16x1xf32>
    %21 = arith.divf %19, %20 : vector<16x1xf32>
    %22 = vector.broadcast %21 : vector<16x1xf32> to vector<16x32xf32>
    %23 = arith.subf %0, %22 : vector<16x32xf32>
    %24 = arith.mulf %23, %23 : vector<16x32xf32>
    %cst_20 = arith.constant dense<0.000000e+00> : vector<16xf32>
    %25 = vector.multi_reduction <add>, %24, %cst_20 [1] : vector<16x32xf32> to vector<16xf32>
    %26 = vector.shape_cast %25 : vector<16xf32> to vector<16x1xf32>
    %cst_21 = arith.constant 3.200000e+01 : f32
    %27 = vector.broadcast %cst_21 : f32 to vector<16x1xf32>
    %28 = arith.divf %26, %27 : vector<16x1xf32>
    %cst_22 = arith.constant 9.99999997E-7 : f32
    %29 = vector.broadcast %cst_22 : f32 to vector<16x1xf32>
    %30 = arith.addf %28, %29 : vector<16x1xf32>
    %31 = math.rsqrt %30 : vector<16x1xf32>
    %32 = vector.broadcast %31 : vector<16x1xf32> to vector<16x32xf32>
    %33 = arith.mulf %23, %32 : vector<16x32xf32>
    %34 = arith.mulf %33, %9 : vector<16x32xf32>
    %35 = arith.addf %34, %10 : vector<16x32xf32>
    %cst_23 = arith.constant dense<0.000000e+00> : vector<16x32xf32>
    %36 = tpu.matmul %35, %3, %cst_23 {dimension_numbers = #tpu.dot_dimension_numbers<[1], [0], [0], [1], [0, 0, 1, 1], [], []>} : vector<16x32xf32>, vector<32x32xf32>, vector<16x32xf32> -> vector<16x32xf32>
    %37 = arith.addf %36, %13 : vector<16x32xf32>
    %cst_24 = arith.constant dense<0.000000e+00> : vector<16x32xf32>
    %38 = tpu.matmul %35, %4, %cst_24 {dimension_numbers = #tpu.dot_dimension_numbers<[1], [0], [0], [1], [0, 0, 1, 1], [], []>} : vector<16x32xf32>, vector<32x32xf32>, vector<16x32xf32> -> vector<16x32xf32>
    %cst_25 = arith.constant dense<0.000000e+00> : vector<16x32xf32>
    %39 = tpu.matmul %35, %5, %cst_25 {dimension_numbers = #tpu.dot_dimension_numbers<[1], [0], [0], [1], [0, 0, 1, 1], [], []>} : vector<16x32xf32>, vector<32x32xf32>, vector<16x32xf32> -> vector<16x32xf32>
    %40 = arith.addf %39, %14 : vector<16x32xf32>
    %41 = tpu.concatenate %37, %37, %37, %37 in 0 : vector<16x32xf32>, vector<16x32xf32>, vector<16x32xf32>, vector<16x32xf32> -> vector<64x32xf32>
    %42 = arith.mulf %1, %41 : vector<64x32xf32>
    %cst_26 = arith.constant dense<0.000000e+00> : vector<64x16xf32>
    %43 = tpu.matmul %42, %38, %cst_26 {dimension_numbers = #tpu.dot_dimension_numbers<[1], [1], [0], [0], [0, 0, 1, 0], [], []>} : vector<64x32xf32>, vector<16x32xf32>, vector<64x16xf32> -> vector<64x16xf32>
    %44 = arith.addf %43, %2 : vector<64x16xf32>
    %cst_27 = arith.constant dense<0xFF800000> : vector<64xf32>
    %45 = vector.multi_reduction <maximumf>, %44, %cst_27 [1] : vector<64x16xf32> to vector<64xf32>
    %46 = vector.shape_cast %45 : vector<64xf32> to vector<64x1xf32>
    %47 = vector.broadcast %46 : vector<64x1xf32> to vector<64x16xf32>
    %48 = arith.subf %44, %47 : vector<64x16xf32>
    %49 = math.exp %48 : vector<64x16xf32>
    %cst_28 = arith.constant dense<0.000000e+00> : vector<64xf32>
    %50 = vector.multi_reduction <add>, %49, %cst_28 [1] : vector<64x16xf32> to vector<64xf32>
    %51 = vector.shape_cast %50 : vector<64xf32> to vector<64x1xf32>
    %52 = tpu.reciprocal %51 : vector<64x1xf32> -> vector<64x1xf32>
    %53 = vector.broadcast %52 : vector<64x1xf32> to vector<64x16xf32>
    %54 = arith.mulf %49, %53 : vector<64x16xf32>
    %cst_29 = arith.constant dense<0.000000e+00> : vector<64x32xf32>
    %55 = tpu.matmul %54, %40, %cst_29 {dimension_numbers = #tpu.dot_dimension_numbers<[1], [0], [0], [1], [0, 0, 1, 1], [], []>} : vector<64x16xf32>, vector<16x32xf32>, vector<64x32xf32> -> vector<64x32xf32>
    %56 = arith.mulf %55, %1 : vector<64x32xf32>
    %57 = vector.extract_strided_slice %56 {offsets = [0, 0], sizes = [16, 32], strides = [1, 1]} : vector<64x32xf32> to vector<16x32xf32>
    %58 = vector.extract_strided_slice %56 {offsets = [16, 0], sizes = [16, 32], strides = [1, 1]} : vector<64x32xf32> to vector<16x32xf32>
    %59 = arith.addf %57, %58 : vector<16x32xf32>
    %60 = vector.extract_strided_slice %56 {offsets = [32, 0], sizes = [16, 32], strides = [1, 1]} : vector<64x32xf32> to vector<16x32xf32>
    %61 = arith.addf %59, %60 : vector<16x32xf32>
    %62 = vector.extract_strided_slice %56 {offsets = [48, 0], sizes = [16, 32], strides = [1, 1]} : vector<64x32xf32> to vector<16x32xf32>
    %63 = arith.addf %61, %62 : vector<16x32xf32>
    %cst_30 = arith.constant dense<0.000000e+00> : vector<16x32xf32>
    %64 = tpu.matmul %63, %6, %cst_30 {dimension_numbers = #tpu.dot_dimension_numbers<[1], [0], [0], [1], [0, 0, 1, 1], [], []>} : vector<16x32xf32>, vector<32x32xf32>, vector<16x32xf32> -> vector<16x32xf32>
    %65 = arith.addf %64, %15 : vector<16x32xf32>
    %66 = arith.addf %65, %0 : vector<16x32xf32>
    %cst_31 = arith.constant dense<0.000000e+00> : vector<16xf32>
    %67 = vector.multi_reduction <add>, %66, %cst_31 [1] : vector<16x32xf32> to vector<16xf32>
    %68 = vector.shape_cast %67 : vector<16xf32> to vector<16x1xf32>
    %cst_32 = arith.constant 3.200000e+01 : f32
    %69 = vector.broadcast %cst_32 : f32 to vector<16x1xf32>
    %70 = arith.divf %68, %69 : vector<16x1xf32>
    %71 = vector.broadcast %70 : vector<16x1xf32> to vector<16x32xf32>
    %72 = arith.subf %66, %71 : vector<16x32xf32>
    %73 = arith.mulf %72, %72 : vector<16x32xf32>
    %cst_33 = arith.constant dense<0.000000e+00> : vector<16xf32>
    %74 = vector.multi_reduction <add>, %73, %cst_33 [1] : vector<16x32xf32> to vector<16xf32>
    %75 = vector.shape_cast %74 : vector<16xf32> to vector<16x1xf32>
    %cst_34 = arith.constant 3.200000e+01 : f32
    %76 = vector.broadcast %cst_34 : f32 to vector<16x1xf32>
    %77 = arith.divf %75, %76 : vector<16x1xf32>
    %cst_35 = arith.constant 9.99999997E-7 : f32
    %78 = vector.broadcast %cst_35 : f32 to vector<16x1xf32>
    %79 = arith.addf %77, %78 : vector<16x1xf32>
    %80 = math.rsqrt %79 : vector<16x1xf32>
    %81 = vector.broadcast %80 : vector<16x1xf32> to vector<16x32xf32>
    %82 = arith.mulf %72, %81 : vector<16x32xf32>
    %83 = arith.mulf %82, %11 : vector<16x32xf32>
    %84 = arith.addf %83, %12 : vector<16x32xf32>
    %cst_36 = arith.constant dense<0.000000e+00> : vector<16x64xf32>
    %85 = tpu.matmul %84, %7, %cst_36 {dimension_numbers = #tpu.dot_dimension_numbers<[1], [0], [0], [1], [0, 0, 1, 1], [], []>} : vector<16x32xf32>, vector<32x64xf32>, vector<16x64xf32> -> vector<16x64xf32>
    %86 = arith.addf %85, %17 : vector<16x64xf32>
    %cst_37 = arith.constant 5.000000e-01 : f32
    %87 = vector.broadcast %cst_37 : f32 to vector<16x64xf32>
    %88 = arith.mulf %87, %86 : vector<16x64xf32>
    %cst_38 = arith.constant 0.707106769 : f32
    %89 = vector.broadcast %cst_38 : f32 to vector<16x64xf32>
    %90 = arith.mulf %86, %89 : vector<16x64xf32>
    %91 = math.erf %90 : vector<16x64xf32>
    %cst_39 = arith.constant 1.000000e+00 : f32
    %92 = vector.broadcast %cst_39 : f32 to vector<16x64xf32>
    %93 = arith.addf %92, %91 : vector<16x64xf32>
    %94 = arith.mulf %88, %93 : vector<16x64xf32>
    %cst_40 = arith.constant dense<0.000000e+00> : vector<16x32xf32>
    %95 = tpu.matmul %94, %8, %cst_40 {dimension_numbers = #tpu.dot_dimension_numbers<[1], [0], [0], [1], [0, 0, 1, 1], [], []>} : vector<16x64xf32>, vector<64x32xf32>, vector<16x32xf32> -> vector<16x32xf32>
    %96 = arith.addf %95, %16 : vector<16x32xf32>
    %97 = arith.addf %66, %96 : vector<16x32xf32>
    %c0_41 = arith.constant 0 : index
    %c0_42 = arith.constant 0 : index
    %98 = vector.load %arg2[%c0_41, %c0_42] : memref<16x32xf32, #tpu.memory_space<vmem>>, vector<16x32xf32>
    tpu.vector_store %arg2[%c0_41, %c0_42], %97 {strides = array<i32>} : memref<16x32xf32, #tpu.memory_space<vmem>>, vector<16x32xf32>,
    return
  }
}

</mosaic_0001>

<llo_original>
// kernel: tpu_custom_call.1
$region0: #{tpu_custom_call.1}
  #allocation0 [shape = 'u32[]', space=smem, size = 0x4, offset = 0x4, fixed_abs, tag = 'smem constant byte address 0x4 - core index']
  #allocation1 [shape = 'u32[144,128]{1,0:T(1,128)}', space=vmem, size = 0x12000, scoped, tag = 'internal scratch']
  %s0 = inlined_call_operand.hbm [shape: f32[16,32], index: 0, kind: input, shape index: {}]
  %s1 = inlined_call_operand.hbm [shape: f32[496,128], index: 1, kind: input, shape index: {}]
  %s2 = inlined_call_operand.hbm [shape: f32[16,32], index: 2, kind: output, shape index: {}]
  %s3 = sld [smem:[#allocation0]]
  $region26: #{tpu_custom_call.1} parent=0
    _
  %s5 = ssub.s32 1, %s3
  %s6 = scalar_select 0, %s5, %s3
  $region1: #{tpu_custom_call.1} parent=0
    #allocation2 [shape = 'u8[8192]{0}', space=vmem, size = 0x2000, scoped, tag = 'input window, operand 0, single buffered']
    #allocation3 [shape = 's32[1]{0}', space=sflag, size = 0x4, scoped, tag = 'scoped memory for tpu_custom_call.1']
    #allocation4 [shape = 's32[1]{0}', space=sflag, size = 0x4, scoped, tag = 'scoped memory for tpu_custom_call.1']
    #allocation5 [shape = 'u8[253952]{0}', space=vmem, size = 0x3e000, scoped, tag = 'input window, operand 1, single buffered']
    #allocation6 [shape = 's32[1]{0}', space=sflag, size = 0x4, scoped, tag = 'scoped memory for tpu_custom_call.1']
    #allocation7 [shape = 'u8[8192]{0}', space=vmem, size = 0x2000, scoped, tag = 'output window, operand 0, single buffered']
    %7 = vsyncpa [#allocation3], 0
    %8 = vsyncpa [#allocation6], 0
    %9 = vsyncpa [#allocation4], 0
    // Predicated region
    $region2: #{tpu_custom_call.1} parent=1 // pred_check
      _
    $region3: #{tpu_custom_call.1} parent=1 // pred_check_branch
      %11 = sbr.rel (0) target = $region5
    $region4: #{tpu_custom_call.1} parent=1 // pred_region
      %s13 = ssub.s32 256, 256
      %14 = vsyncadd [#allocation3], %s13
      %s15 = sshll.u32 [#allocation2], 4
      %s16 = int_to_ptr.vmem [resolvable:$true] %s15
      %21 = dma.hbm_to_vmem [thread:$0]  %s0, 256, %s16, [#allocation3], 128, 128, 8
    $region5: #{tpu_custom_call.1} parent=1 // pred_fallthru
      _
    // Predicated region
    $region6: #{tpu_custom_call.1} parent=1 // pred_check
      _
    $region7: #{tpu_custom_call.1} parent=1 // pred_check_branch
      %23 = sbr.rel (0) target = $region9
    $region8: #{tpu_custom_call.1} parent=1 // pred_region
      %s25 = ssub.s32 7936, 7936
      %26 = vsyncadd [#allocation6], %s25
      %s27 = sshll.u32 [#allocation5], 4
      %s28 = int_to_ptr.vmem [resolvable:$true] %s27
      %33 = dma.hbm_to_vmem [thread:$0]  %s1, 7936, %s28, [#allocation6], 128, 128, 8
    $region9: #{tpu_custom_call.1} parent=1 // pred_fallthru
      _
    // Predicated region
    $region10: #{tpu_custom_call.1} parent=1 // pred_check
      _
    $region11: #{tpu_custom_call.1} parent=1 // pred_check_branch
      %35 = sbr.rel (0) target = $region13
    $region12: #{tpu_custom_call.1} parent=1 // pred_region
      %36 = dma.done [#allocation3], 256
    $region13: #{tpu_custom_call.1} parent=1 // pred_fallthru
      _
    // Predicated region
    $region14: #{tpu_custom_call.1} parent=1 // pred_check
      _
    $region15: #{tpu_custom_call.1} parent=1 // pred_check_branch
      %38 = sbr.rel (0) target = $region17
    $region16: #{tpu_custom_call.1} parent=1 // pred_region
      %39 = dma.done [#allocation6], 7936
    $region17: #{tpu_custom_call.1} parent=1 // pred_fallthru
      _
    %v40 = vld [vmem:[#allocation2] sm:$0xff]
    %v41 = vld [vmem:[#allocation2 + $0x8] sm:$0xff]
    %v42 = vld [vmem:[#allocation5] sm:$0xff]
    %v43 = vld [vmem:[#allocation5 + $0x8] sm:$0xff]
    %v44 = vld [vmem:[#allocation5 + $0x10] sm:$0xff]
    %v45 = vld [vmem:[#allocation5 + $0x18] sm:$0xff]
    %v46 = vld [vmem:[#allocation5 + $0x20] sm:$0xff]
    %v47 = vld [vmem:[#allocation5 + $0x28] sm:$0xff]
    %v48 = vld [vmem:[#allocation5 + $0x30] sm:$0xff]
    %v49 = vld [vmem:[#allocation5 + $0x38] sm:$0xff]
    %v50 = vld [vmem:[#allocation5 + $0x40] sm:$0xff]
    %v51 = vld [vmem:[#allocation5 + $0x48] sm:$0xff]
    %v52 = vld [vmem:[#allocation5 + $0x50] sm:$0xff]
    %v53 = vld [vmem:[#allocation5 + $0x58] sm:$0xff]
    %v54 = vld [vmem:[#allocation5 + $0x60] sm:$0xff]
    %v55 = vld [vmem:[#allocation5 + $0x68] sm:$0xff]
    %v56 = vld [vmem:[#allocation5 + $0x70] sm:$0xff]
    %v57 = vld [vmem:[#allocation5 + $0x78] sm:$0xff]
    %v58 = vld [vmem:[#allocation5 + $0x80] sm:$0xff]
    %v59 = vld [vmem:[#allocation5 + $0x88] sm:$0xff]
    %v60 = vld [vmem:[#allocation5 + $0x90] sm:$0xff]
    %v61 = vld [vmem:[#allocation5 + $0x98] sm:$0xff]
    %v62 = vld [vmem:[#allocation5 + $0xa0] sm:$0xff]
    %v63 = vld [vmem:[#allocation5 + $0xa8] sm:$0xff]
    %v64 = vld [vmem:[#allocation5 + $0xb0] sm:$0xff]
    %v65 = vld [vmem:[#allocation5 + $0xb8] sm:$0xff]
    %v66 = vld [vmem:[#allocation5 + $0xc0] sm:$0xff]
    %v67 = vld [vmem:[#allocation5 + $0xc8] sm:$0xff]
    %v68 = vld [vmem:[#allocation5 + $0xd0] sm:$0xff]
    %v69 = vld [vmem:[#allocation5 + $0xd8] sm:$0xff]
    %v70 = vld [vmem:[#allocation5 + $0xe0] sm:$0xff]
    %v71 = vld [vmem:[#allocation5 + $0xe8] sm:$0xff]
    %v72 = vld [vmem:[#allocation5 + $0xf0] sm:$0xff]
    %v73 = vld [vmem:[#allocation5 + $0xf8] sm:$0xff]
    %v74 = vld [vmem:[#allocation5 + $0x100] sm:$0xff]
    %v75 = vld [vmem:[#allocation5 + $0x108] sm:$0xff]
    %v76 = vld [vmem:[#allocation5 + $0x110] sm:$0xff]
    %v77 = vld [vmem:[#allocation5 + $0x118] sm:$0xff]
    %v78 = vld [vmem:[#allocation5 + $0x120] sm:$0xff]
    %v79 = vld [vmem:[#allocation5 + $0x128] sm:$0xff]
    %v80 = vld [vmem:[#allocation5 + $0x130] sm:$0xff]
    %v81 = vld [vmem:[#allocation5 + $0x138] sm:$0xff]
    %v82 = vld [vmem:[#allocation5 + $0x140] sm:$0xff]
    %v83 = vld [vmem:[#allocation5 + $0x148] sm:$0xff]
    %v84 = vld [vmem:[#allocation5 + $0x150] sm:$0xff]
    %v85 = vld [vmem:[#allocation5 + $0x158] sm:$0xff]
    %v86 = vld [vmem:[#allocation5 + $0x160] sm:$0xff]
    %v87 = vld [vmem:[#allocation5 + $0x168] sm:$0xff]
    %v88 = vld [vmem:[#allocation5 + $0x170] sm:$0xff]
    %v89 = vld [vmem:[#allocation5 + $0x178] sm:$0xff]
    %v90 = vld [vmem:[#allocation5 + $0x180] sm:$0xff]
    %v91 = vld [vmem:[#allocation5 + $0x188] sm:$0xff]
    %v92 = vld [vmem:[#allocation5 + $0x190] sm:$0xff]
    %v93 = vld [vmem:[#allocation5 + $0x198] sm:$0xff]
    %v94 = vld [vmem:[#allocation5 + $0x1a0] sm:$0xff]
    %v95 = vld [vmem:[#allocation5 + $0x1a8] sm:$0xff]
    %v96 = vld [vmem:[#allocation5 + $0x1b0] sm:$0xff]
    %v97 = vld [vmem:[#allocation5 + $0x1b8] sm:$0xff]
    %v98 = vld [vmem:[#allocation5 + $0x1c0] sm:$0xff]
    %v99 = vld [vmem:[#allocation5 + $0x1c8] sm:$0xff]
    %v100 = vld [vmem:[#allocation5 + $0x1d0] sm:$0xff]
    %v101 = vld [vmem:[#allocation5 + $0x1d8] sm:$0xff]
    %v102 = vld [vmem:[#allocation5 + $0x1e0] sm:$0xff]
    %v103 = vld [vmem:[#allocation5 + $0x1e8] sm:$0xff]
    %vm104 = vcmask 261120
    %v105 = vsel %vm104, %v40, 0.0
    %106 = vadd.xlane.f32.xlu0 %v105
    %v107 = vpop.xlane.xlu0 %106
    %v108 = vsel %vm104, %v41, 0.0
    %109 = vadd.xlane.f32.xlu0 %v108
    %v110 = vpop.xlane.xlu0 %109
    %v111 = vrcp.pop 32.0
    %v112 = vmul.f32 %v107, %v111
    %v113 = vmul.f32 %v110, %v111
    %v114 = vsub.f32 %v40, %v112
    %v115 = vsub.f32 %v41, %v113
    %v116 = vmul.f32 %v114, %v114
    %v117 = vmul.f32 %v115, %v115
    %v118 = vsel %vm104, %v116, 0.0
    %119 = vadd.xlane.f32.xlu0 %v118
    %v120 = vpop.xlane.xlu0 %119
    %v121 = vsel %vm104, %v117, 0.0
    %122 = vadd.xlane.f32.xlu0 %v121
    %v123 = vpop.xlane.xlu0 %122
    %v124 = vmul.f32 %v120, %v111
    %v125 = vmul.f32 %v123, %v111
    %v126 = vadd.f32 %v124, 1e-06
    %v127 = vadd.f32 %v125, 1e-06
    %v128 = vrsqrt.pop %v126
    %v129 = vrsqrt.pop %v127
    %v130 = vmul.f32 %v114, %v128
    %v131 = vmul.f32 %v115, %v129
    %v132 = vmul.f32 %v130, %v86
    %v133 = vmul.f32 %v131, %v87
    %v134 = vadd.f32 %v132, %v88
    %v135 = vadd.f32 %v133, %v89
    %v137 = vsel %vm104, %v134, 0
    %v140 = vsel %vm104, %v135, 0
    %142 = vmatprep.subr.mxu0 0.0
    %143 = vmatpush1.msra.mxu0 %v58
    %144 = vmatprep.subr.mxu0 0.0
    %145 = vmatpush1.msra.mxu0 %v59
    %146 = vmatprep.subr.mxu0 0.0
    %147 = vmatpush1.msra.mxu0 %v60
    %148 = vmatprep.subr.mxu0 0.0
    %149 = vmatpush1.msra.mxu0 %v61
    %150 = vmatprep.subr.mxu0 0.0
    %151 = vmatpush1.msra.mxu0 0.0
    %152 = vmatprep.subr.mxu0 0.0
    %153 = vmatpush1.msra.mxu0 0.0
    %154 = vmatprep.subr.mxu0 0.0
    %155 = vmatpush1.msra.mxu0 0.0
    %156 = vmatprep.subr.mxu0 0.0
    %157 = vmatpush1.msra.mxu0 0.0
    %158 = vmatprep.subr.mxu0 0.0
    %159 = vmatpush1.msra.mxu0 0.0
    %160 = vmatprep.subr.mxu0 0.0
    %161 = vmatpush1.msra.mxu0 0.0
    %162 = vmatprep.subr.mxu0 0.0
    %163 = vmatpush1.msra.mxu0 0.0
    %164 = vmatprep.subr.mxu0 0.0
    %165 = vmatpush1.msra.mxu0 0.0
    %166 = vmatprep.subr.mxu0 0.0
    %167 = vmatpush1.msra.mxu0 0.0
    %168 = vmatprep.subr.mxu0 0.0
    %169 = vmatpush1.msra.mxu0 0.0
    %170 = vmatprep.subr.mxu0 0.0
    %171 = vmatpush1.msra.mxu0 0.0
    %172 = vmatprep.subr.mxu0 0.0
    %173 = vmatpush1.msra.mxu0 0.0
    %174 = vmatprep.subr.mxu0 0.0
    %175 = vmatpush1.msra.mxu0 0.0
    %176 = vmatprep.subr.mxu0 0.0
    %177 = vmatpush1.msra.mxu0 0.0
    %178 = vmatprep.subr.mxu0 0.0
    %179 = vmatpush1.msra.mxu0 0.0
    %180 = vmatprep.subr.mxu0 0.0
    %181 = vmatpush1.msra.mxu0 0.0
    %182 = vmatprep.subr.mxu0 0.0
    %183 = vmatpush1.msra.mxu0 0.0
    %184 = vmatprep.subr.mxu0 0.0
    %185 = vmatpush1.msra.mxu0 0.0
    %186 = vmatprep.subr.mxu0 0.0
    %187 = vmatpush1.msra.mxu0 0.0
    %188 = vmatprep.subr.mxu0 0.0
    %189 = vmatpush1.msra.mxu0 0.0
    %190 = vmatprep.subr.mxu0 0.0
    %191 = vmatpush1.msra.mxu0 0.0
    %192 = vmatprep.subr.mxu0 0.0
    %193 = vmatpush1.msra.mxu0 0.0
    %194 = vmatprep.subr.mxu0 0.0
    %195 = vmatpush1.msra.mxu0 0.0
    %196 = vmatprep.subr.mxu0 0.0
    %197 = vmatpush1.msra.mxu0 0.0
    %198 = vmatprep.subr.mxu0 0.0
    %199 = vmatpush1.msra.mxu0 0.0
    %200 = vmatprep.subr.mxu0 0.0
    %201 = vmatpush1.msra.mxu0 0.0
    %202 = vmatprep.subr.mxu0 0.0
    %203 = vmatpush1.msra.mxu0 0.0
    %204 = vmatprep.subr.mxu0 0.0
    %205 = vmatpush1.msra.mxu0 0.0
    %206 = vmatprep.mubr.f32.mxu0 0.0
    %207 = vmatmul.mubr.f32.gmra.mrb[0].mxu0 %v137
    %v208 = vpop.f32.mrb[0].mxu0
    %v209 = vadd.f32 %v94, %v208
    %v210 = vpop.f32.mrb[0].mxu0
    %211 = vmatprep.mubr.f32.mxu0 0.0
    %212 = vmatmul.mubr.f32.gmra.mrb[0].mxu0 %v140
    %v213 = vpop.f32.mrb[0].mxu0
    %v214 = vadd.f32 %v95, %v213
    %v215 = vpop.f32.mrb[0].mxu0
    %216 = vdwg.mxu0
    %217 = vmatprep.subr.mxu0 0.0
    %218 = vmatpush1.msra.mxu0 %v62
    %219 = vmatprep.subr.mxu0 0.0
    %220 = vmatpush1.msra.mxu0 %v63
    %221 = vmatprep.subr.mxu0 0.0
    %222 = vmatpush1.msra.mxu0 %v64
    %223 = vmatprep.subr.mxu0 0.0
    %224 = vmatpush1.msra.mxu0 %v65
    %225 = vmatprep.subr.mxu0 0.0
    %226 = vmatpush1.msra.mxu0 0.0
    %227 = vmatprep.subr.mxu0 0.0
    %228 = vmatpush1.msra.mxu0 0.0
    %229 = vmatprep.subr.mxu0 0.0
    %230 = vmatpush1.msra.mxu0 0.0
    %231 = vmatprep.subr.mxu0 0.0
    %232 = vmatpush1.msra.mxu0 0.0
    %233 = vmatprep.subr.mxu0 0.0
    %234 = vmatpush1.msra.mxu0 0.0
    %235 = vmatprep.subr.mxu0 0.0
    %236 = vmatpush1.msra.mxu0 0.0
    %237 = vmatprep.subr.mxu0 0.0
    %238 = vmatpush1.msra.mxu0 0.0
    %239 = vmatprep.subr.mxu0 0.0
    %240 = vmatpush1.msra.mxu0 0.0
    %241 = vmatprep.subr.mxu0 0.0
    %242 = vmatpush1.msra.mxu0 0.0
    %243 = vmatprep.subr.mxu0 0.0
    %244 = vmatpush1.msra.mxu0 0.0
    %245 = vmatprep.subr.mxu0 0.0
    %246 = vmatpush1.msra.mxu0 0.0
    %247 = vmatprep.subr.mxu0 0.0
    %248 = vmatpush1.msra.mxu0 0.0
    %249 = vmatprep.subr.mxu0 0.0
    %250 = vmatpush1.msra.mxu0 0.0
    %251 = vmatprep.subr.mxu0 0.0
    %252 = vmatpush1.msra.mxu0 0.0
    %253 = vmatprep.subr.mxu0 0.0
    %254 = vmatpush1.msra.mxu0 0.0
    %255 = vmatprep.subr.mxu0 0.0
    %256 = vmatpush1.msra.mxu0 0.0
    %257 = vmatprep.subr.mxu0 0.0
    %258 = vmatpush1.msra.mxu0 0.0
    %259 = vmatprep.subr.mxu0 0.0
    %260 = vmatpush1.msra.mxu0 0.0
    %261 = vmatprep.subr.mxu0 0.0
    %262 = vmatpush1.msra.mxu0 0.0
    %263 = vmatprep.subr.mxu0 0.0
    %264 = vmatpush1.msra.mxu0 0.0
    %265 = vmatprep.subr.mxu0 0.0
    %266 = vmatpush1.msra.mxu0 0.0
    %267 = vmatprep.subr.mxu0 0.0
    %268 = vmatpush1.msra.mxu0 0.0
    %269 = vmatprep.subr.mxu0 0.0
    %270 = vmatpush1.msra.mxu0 0.0
    %271 = vmatprep.subr.mxu0 0.0
    %272 = vmatpush1.msra.mxu0 0.0
    %273 = vmatprep.subr.mxu0 0.0
    %274 = vmatpush1.msra.mxu0 0.0
    %275 = vmatprep.subr.mxu0 0.0
    %276 = vmatpush1.msra.mxu0 0.0
    %277 = vmatprep.subr.mxu0 0.0
    %278 = vmatpush1.msra.mxu0 0.0
    %279 = vmatprep.subr.mxu0 0.0
    %280 = vmatpush1.msra.mxu0 0.0
    %281 = vmatprep.mubr.f32.mxu0 0.0
    %282 = vmatmul.mubr.f32.gmra.mrb[0].mxu0 %v137
    %v283 = vpop.f32.mrb[0].mxu0
    %v284 = vadd.f32 0.0, %v283
    %v285 = vpop.f32.mrb[0].mxu0
    %286 = vmatprep.mubr.f32.mxu0 0.0
    %287 = vmatmul.mubr.f32.gmra.mrb[0].mxu0 %v140
    %v288 = vpop.f32.mrb[0].mxu0
    %v289 = vadd.f32 0.0, %v288
    %v290 = vpop.f32.mrb[0].mxu0
    %291 = vdwg.mxu0
    %292 = vmatprep.subr.mxu0 0.0
    %293 = vmatpush1.msra.mxu0 %v66
    %294 = vmatprep.subr.mxu0 0.0
    %295 = vmatpush1.msra.mxu0 %v67
    %296 = vmatprep.subr.mxu0 0.0
    %297 = vmatpush1.msra.mxu0 %v68
    %298 = vmatprep.subr.mxu0 0.0
    %299 = vmatpush1.msra.mxu0 %v69
    %300 = vmatprep.subr.mxu0 0.0
    %301 = vmatpush1.msra.mxu0 0.0
    %302 = vmatprep.subr.mxu0 0.0
    %303 = vmatpush1.msra.mxu0 0.0
    %304 = vmatprep.subr.mxu0 0.0
    %305 = vmatpush1.msra.mxu0 0.0
    %306 = vmatprep.subr.mxu0 0.0
    %307 = vmatpush1.msra.mxu0 0.0
    %308 = vmatprep.subr.mxu0 0.0
    %309 = vmatpush1.msra.mxu0 0.0
    %310 = vmatprep.subr.mxu0 0.0
    %311 = vmatpush1.msra.mxu0 0.0
    %312 = vmatprep.subr.mxu0 0.0
    %313 = vmatpush1.msra.mxu0 0.0
    %314 = vmatprep.subr.mxu0 0.0
    %315 = vmatpush1.msra.mxu0 0.0
    %316 = vmatprep.subr.mxu0 0.0
    %317 = vmatpush1.msra.mxu0 0.0
    %318 = vmatprep.subr.mxu0 0.0
    %319 = vmatpush1.msra.mxu0 0.0
    %320 = vmatprep.subr.mxu0 0.0
    %321 = vmatpush1.msra.mxu0 0.0
    %322 = vmatprep.subr.mxu0 0.0
    %323 = vmatpush1.msra.mxu0 0.0
    %324 = vmatprep.subr.mxu0 0.0
    %325 = vmatpush1.msra.mxu0 0.0
    %326 = vmatprep.subr.mxu0 0.0
    %327 = vmatpush1.msra.mxu0 0.0
    %328 = vmatprep.subr.mxu0 0.0
    %329 = vmatpush1.msra.mxu0 0.0
    %330 = vmatprep.subr.mxu0 0.0
    %331 = vmatpush1.msra.mxu0 0.0
    %332 = vmatprep.subr.mxu0 0.0
    %333 = vmatpush1.msra.mxu0 0.0
    %334 = vmatprep.subr.mxu0 0.0
    %335 = vmatpush1.msra.mxu0 0.0
    %336 = vmatprep.subr.mxu0 0.0
    %337 = vmatpush1.msra.mxu0 0.0
    %338 = vmatprep.subr.mxu0 0.0
    %339 = vmatpush1.msra.mxu0 0.0
    %340 = vmatprep.subr.mxu0 0.0
    %341 = vmatpush1.msra.mxu0 0.0
    %342 = vmatprep.subr.mxu0 0.0
    %343 = vmatpush1.msra.mxu0 0.0
    %344 = vmatprep.subr.mxu0 0.0
    %345 = vmatpush1.msra.mxu0 0.0
    %346 = vmatprep.subr.mxu0 0.0
    %347 = vmatpush1.msra.mxu0 0.0
    %348 = vmatprep.subr.mxu0 0.0
    %349 = vmatpush1.msra.mxu0 0.0
    %350 = vmatprep.subr.mxu0 0.0
    %351 = vmatpush1.msra.mxu0 0.0
    %352 = vmatprep.subr.mxu0 0.0
    %353 = vmatpush1.msra.mxu0 0.0
    %354 = vmatprep.subr.mxu0 0.0
    %355 = vmatpush1.msra.mxu0 0.0
    %356 = vmatprep.mubr.f32.mxu0 0.0
    %357 = vmatmul.mubr.f32.gmra.mrb[0].mxu0 %v137
    %v358 = vpop.f32.mrb[0].mxu0
    %v359 = vadd.f32 %v96, %v358
    %v360 = vpop.f32.mrb[0].mxu0
    %361 = vmatprep.mubr.f32.mxu0 0.0
    %362 = vmatmul.mubr.f32.gmra.mrb[0].mxu0 %v140
    %v363 = vpop.f32.mrb[0].mxu0
    %v364 = vadd.f32 %v97, %v363
    %v365 = vpop.f32.mrb[0].mxu0
    %366 = vdwg.mxu0
    %v367 = vmul.f32 %v42, %v209
    %v368 = vmul.f32 %v43, %v214
    %v369 = vmul.f32 %v44, %v209
    %v370 = vmul.f32 %v45, %v214
    %v371 = vmul.f32 %v46, %v209
    %v372 = vmul.f32 %v47, %v214
    %v373 = vmul.f32 %v48, %v209
    %v374 = vmul.f32 %v49, %v214
    %v376 = vsel %vm104, %v367, 0
    %v379 = vsel %vm104, %v368, 0
    %v382 = vsel %vm104, %v369, 0
    %v385 = vsel %vm104, %v370, 0
    %v388 = vsel %vm104, %v371, 0
    %v391 = vsel %vm104, %v372, 0
    %v394 = vsel %vm104, %v373, 0
    %v397 = vsel %vm104, %v374, 0
    %v400 = vsel %vm104, %v284, 0
    %v403 = vsel %vm104, %v289, 0
    %405 = vmatprep.subr.mxu0 0.0
    %406 = vmatpush1.xpose.msra.mxu0 %v400
    %407 = vmatprep.subr.mxu0 0.0
    %408 = vmatpush1.xpose.msra.mxu0 %v403
    %409 = vmatprep.subr.mxu0 0.0
    %410 = vmatpush1.xpose.msra.mxu0 0.0
    %411 = vmatprep.subr.mxu0 0.0
    %412 = vmatpush1.xpose.msra.mxu0 0.0
    %413 = vmatprep.subr.mxu0 0.0
    %414 = vmatpush1.xpose.msra.mxu0 0.0
    %415 = vmatprep.subr.mxu0 0.0
    %416 = vmatpush1.xpose.msra.mxu0 0.0
    %417 = vmatprep.subr.mxu0 0.0
    %418 = vmatpush1.xpose.msra.mxu0 0.0
    %419 = vmatprep.subr.mxu0 0.0
    %420 = vmatpush1.xpose.msra.mxu0 0.0
    %421 = vmatprep.subr.mxu0 0.0
    %422 = vmatpush1.xpose.msra.mxu0 0.0
    %423 = vmatprep.subr.mxu0 0.0
    %424 = vmatpush1.xpose.msra.mxu0 0.0
    %425 = vmatprep.subr.mxu0 0.0
    %426 = vmatpush1.xpose.msra.mxu0 0.0
    %427 = vmatprep.subr.mxu0 0.0
    %428 = vmatpush1.xpose.msra.mxu0 0.0
    %429 = vmatprep.subr.mxu0 0.0
    %430 = vmatpush1.xpose.msra.mxu0 0.0
    %431 = vmatprep.subr.mxu0 0.0
    %432 = vmatpush1.xpose.msra.mxu0 0.0
    %433 = vmatprep.subr.mxu0 0.0
    %434 = vmatpush1.xpose.msra.mxu0 0.0
    %435 = vmatprep.subr.mxu0 0.0
    %436 = vmatpush1.xpose.msra.mxu0 0.0
    %437 = vmatprep.subr.mxu0 0.0
    %438 = vmatpush1.xpose.msra.mxu0 0.0
    %439 = vmatprep.subr.mxu0 0.0
    %440 = vmatpush1.xpose.msra.mxu0 0.0
    %441 = vmatprep.subr.mxu0 0.0
    %442 = vmatpush1.xpose.msra.mxu0 0.0
    %443 = vmatprep.subr.mxu0 0.0
    %444 = vmatpush1.xpose.msra.mxu0 0.0
    %445 = vmatprep.subr.mxu0 0.0
    %446 = vmatpush1.xpose.msra.mxu0 0.0
    %447 = vmatprep.subr.mxu0 0.0
    %448 = vmatpush1.xpose.msra.mxu0 0.0
    %449 = vmatprep.subr.mxu0 0.0
    %450 = vmatpush1.xpose.msra.mxu0 0.0
    %451 = vmatprep.subr.mxu0 0.0
    %452 = vmatpush1.xpose.msra.mxu0 0.0
    %453 = vmatprep.subr.mxu0 0.0
    %454 = vmatpush1.xpose.msra.mxu0 0.0
    %455 = vmatprep.subr.mxu0 0.0
    %456 = vmatpush1.xpose.msra.mxu0 0.0
    %457 = vmatprep.subr.mxu0 0.0
    %458 = vmatpush1.xpose.msra.mxu0 0.0
    %459 = vmatprep.subr.mxu0 0.0
    %460 = vmatpush1.xpose.msra.mxu0 0.0
    %461 = vmatprep.subr.mxu0 0.0
    %462 = vmatpush1.xpose.msra.mxu0 0.0
    %463 = vmatprep.subr.mxu0 0.0
    %464 = vmatpush1.xpose.msra.mxu0 0.0
    %465 = vmatprep.subr.mxu0 0.0
    %466 = vmatpush1.xpose.msra.mxu0 0.0
    %467 = vmatprep.subr.mxu0 0.0
    %468 = vmatpush1.xpose.msra.mxu0 0.0
    %469 = vmatprep.mubr.f32.mxu0 0.0
    %470 = vmatmul.mubr.f32.gmra.mrb[0].mxu0 %v376
    %v471 = vpop.f32.mrb[0].mxu0
    %v472 = vadd.f32 %v50, %v471
    %v473 = vpop.f32.mrb[0].mxu0
    %474 = vmatprep.mubr.f32.mxu0 0.0
    %475 = vmatmul.mubr.f32.gmra.mrb[0].mxu0 %v379
    %v476 = vpop.f32.mrb[0].mxu0
    %v477 = vadd.f32 %v51, %v476
    %v478 = vpop.f32.mrb[0].mxu0
    %479 = vmatprep.mubr.f32.mxu0 0.0
    %480 = vmatmul.mubr.f32.gmra.mrb[0].mxu0 %v382
    %v481 = vpop.f32.mrb[0].mxu0
    %v482 = vadd.f32 %v52, %v481
    %v483 = vpop.f32.mrb[0].mxu0
    %484 = vmatprep.mubr.f32.mxu0 0.0
    %485 = vmatmul.mubr.f32.gmra.mrb[0].mxu0 %v385
    %v486 = vpop.f32.mrb[0].mxu0
    %v487 = vadd.f32 %v53, %v486
    %v488 = vpop.f32.mrb[0].mxu0
    %489 = vmatprep.mubr.f32.mxu0 0.0
    %490 = vmatmul.mubr.f32.gmra.mrb[0].mxu0 %v388
    %v491 = vpop.f32.mrb[0].mxu0
    %v492 = vadd.f32 %v54, %v491
    %v493 = vpop.f32.mrb[0].mxu0
    %494 = vmatprep.mubr.f32.mxu0 0.0
    %495 = vmatmul.mubr.f32.gmra.mrb[0].mxu0 %v391
    %v496 = vpop.f32.mrb[0].mxu0
    %v497 = vadd.f32 %v55, %v496
    %v498 = vpop.f32.mrb[0].mxu0
    %499 = vmatprep.mubr.f32.mxu0 0.0
    %500 = vmatmul.mubr.f32.gmra.mrb[0].mxu0 %v394
    %v501 = vpop.f32.mrb[0].mxu0
    %v502 = vadd.f32 %v56, %v501
    %v503 = vpop.f32.mrb[0].mxu0
    %504 = vmatprep.mubr.f32.mxu0 0.0
    %505 = vmatmul.mubr.f32.gmra.mrb[0].mxu0 %v397
    %v506 = vpop.f32.mrb[0].mxu0
    %v507 = vadd.f32 %v57, %v506
    %v508 = vpop.f32.mrb[0].mxu0
    %509 = vdwg.mxu0
    %vm510 = vcmask 130048
    %v511 = vsel %vm510, %v472, -inf
    %512 = vmax.xlane.f32.xlu0 %v511
    %v513 = vpop.xlane.xlu0 %512
    %v514 = vsel %vm510, %v477, -inf
    %515 = vmax.xlane.f32.xlu0 %v514
    %v516 = vpop.xlane.xlu0 %515
    %v517 = vsel %vm510, %v482, -inf
    %518 = vmax.xlane.f32.xlu0 %v517
    %v519 = vpop.xlane.xlu0 %518
    %v520 = vsel %vm510, %v487, -inf
    %521 = vmax.xlane.f32.xlu0 %v520
    %v522 = vpop.xlane.xlu0 %521
    %v523 = vsel %vm510, %v492, -inf
    %524 = vmax.xlane.f32.xlu0 %v523
    %v525 = vpop.xlane.xlu0 %524
    %v526 = vsel %vm510, %v497, -inf
    %527 = vmax.xlane.f32.xlu0 %v526
    %v528 = vpop.xlane.xlu0 %527
    %v529 = vsel %vm510, %v502, -inf
    %530 = vmax.xlane.f32.xlu0 %v529
    %v531 = vpop.xlane.xlu0 %530
    %v532 = vsel %vm510, %v507, -inf
    %533 = vmax.xlane.f32.xlu0 %v532
    %v534 = vpop.xlane.xlu0 %533
    %v535 = vsub.f32 %v472, %v513
    %v536 = vsub.f32 %v477, %v516
    %v537 = vsub.f32 %v482, %v519
    %v538 = vsub.f32 %v487, %v522
    %v539 = vsub.f32 %v492, %v525
    %v540 = vsub.f32 %v497, %v528
    %v541 = vsub.f32 %v502, %v531
    %v542 = vsub.f32 %v507, %v534
    %v543 = vmul.f32 %v535, 1.442695
    %v544 = vpow.pop %v543
    %v545 = vmul.f32 %v536, 1.442695
    %v546 = vpow.pop %v545
    %v547 = vmul.f32 %v537, 1.442695
    %v548 = vpow.pop %v547
    %v549 = vmul.f32 %v538, 1.442695
    %v550 = vpow.pop %v549
    %v551 = vmul.f32 %v539, 1.442695
    %v552 = vpow.pop %v551
    %v553 = vmul.f32 %v540, 1.442695
    %v554 = vpow.pop %v553
    %v555 = vmul.f32 %v541, 1.442695
    %v556 = vpow.pop %v555
    %v557 = vmul.f32 %v542, 1.442695
    %v558 = vpow.pop %v557
    %v559 = vsel %vm510, %v544, 0.0
    %560 = vadd.xlane.f32.xlu0 %v559
    %v561 = vpop.xlane.xlu0 %560
    %v562 = vsel %vm510, %v546, 0.0
    %563 = vadd.xlane.f32.xlu0 %v562
    %v564 = vpop.xlane.xlu0 %563
    %v565 = vsel %vm510, %v548, 0.0
    %566 = vadd.xlane.f32.xlu0 %v565
    %v567 = vpop.xlane.xlu0 %566
    %v568 = vsel %vm510, %v550, 0.0
    %569 = vadd.xlane.f32.xlu0 %v568
    %v570 = vpop.xlane.xlu0 %569
    %v571 = vsel %vm510, %v552, 0.0
    %572 = vadd.xlane.f32.xlu0 %v571
    %v573 = vpop.xlane.xlu0 %572
    %v574 = vsel %vm510, %v554, 0.0
    %575 = vadd.xlane.f32.xlu0 %v574
    %v576 = vpop.xlane.xlu0 %575
    %v577 = vsel %vm510, %v556, 0.0
    %578 = vadd.xlane.f32.xlu0 %v577
    %v579 = vpop.xlane.xlu0 %578
    %v580 = vsel %vm510, %v558, 0.0
    %581 = vadd.xlane.f32.xlu0 %v580
    %v582 = vpop.xlane.xlu0 %581
    %v583 = vrcp.pop %v561
    %v584 = vrcp.pop %v564
    %v585 = vrcp.pop %v567
    %v586 = vrcp.pop %v570
    %v587 = vrcp.pop %v573
    %v588 = vrcp.pop %v576
    %v589 = vrcp.pop %v579
    %v590 = vrcp.pop %v582
    %v591 = vmul.f32 %v544, %v583
    %v592 = vmul.f32 %v546, %v584
    %v593 = vmul.f32 %v548, %v585
    %v594 = vmul.f32 %v550, %v586
    %v595 = vmul.f32 %v552, %v587
    %v596 = vmul.f32 %v554, %v588
    %v597 = vmul.f32 %v556, %v589
    %v598 = vmul.f32 %v558, %v590
    %v600 = vsel %vm510, %v591, 0
    %v603 = vsel %vm510, %v592, 0
    %v606 = vsel %vm510, %v593, 0
    %v609 = vsel %vm510, %v594, 0
    %v612 = vsel %vm510, %v595, 0
    %v615 = vsel %vm510, %v596, 0
    %v618 = vsel %vm510, %v597, 0
    %v621 = vsel %vm510, %v598, 0
    %623 = vmatprep.subr.mxu0 0.0
    %624 = vmatpush1.msra.mxu0 %v359
    %625 = vmatprep.subr.mxu0 0.0
    %626 = vmatpush1.msra.mxu0 %v364
    %627 = vmatprep.subr.mxu0 0.0
    %628 = vmatpush1.msra.mxu0 0.0
    %629 = vmatprep.subr.mxu0 0.0
    %630 = vmatpush1.msra.mxu0 0.0
    %631 = vmatprep.subr.mxu0 0.0
    %632 = vmatpush1.msra.mxu0 0.0
    %633 = vmatprep.subr.mxu0 0.0
    %634 = vmatpush1.msra.mxu0 0.0
    %635 = vmatprep.subr.mxu0 0.0
    %636 = vmatpush1.msra.mxu0 0.0
    %637 = vmatprep.subr.mxu0 0.0
    %638 = vmatpush1.msra.mxu0 0.0
    %639 = vmatprep.subr.mxu0 0.0
    %640 = vmatpush1.msra.mxu0 0.0
    %641 = vmatprep.subr.mxu0 0.0
    %642 = vmatpush1.msra.mxu0 0.0
    %643 = vmatprep.subr.mxu0 0.0
    %644 = vmatpush1.msra.mxu0 0.0
    %645 = vmatprep.subr.mxu0 0.0
    %646 = vmatpush1.msra.mxu0 0.0
    %647 = vmatprep.subr.mxu0 0.0
    %648 = vmatpush1.msra.mxu0 0.0
    %649 = vmatprep.subr.mxu0 0.0
    %650 = vmatpush1.msra.mxu0 0.0
    %651 = vmatprep.subr.mxu0 0.0
    %652 = vmatpush1.msra.mxu0 0.0
    %653 = vmatprep.subr.mxu0 0.0
    %654 = vmatpush1.msra.mxu0 0.0
    %655 = vmatprep.subr.mxu0 0.0
    %656 = vmatpush1.msra.mxu0 0.0
    %657 = vmatprep.subr.mxu0 0.0
    %658 = vmatpush1.msra.mxu0 0.0
    %659 = vmatprep.subr.mxu0 0.0
    %660 = vmatpush1.msra.mxu0 0.0
    %661 = vmatprep.subr.mxu0 0.0
    %662 = vmatpush1.msra.mxu0 0.0
    %663 = vmatprep.subr.mxu0 0.0
    %664 = vmatpush1.msra.mxu0 0.0
    %665 = vmatprep.subr.mxu0 0.0
    %666 = vmatpush1.msra.mxu0 0.0
    %667 = vmatprep.subr.mxu0 0.0
    %668 = vmatpush1.msra.mxu0 0.0
    %669 = vmatprep.subr.mxu0 0.0
    %670 = vmatpush1.msra.mxu0 0.0
    %671 = vmatprep.subr.mxu0 0.0
    %672 = vmatpush1.msra.mxu0 0.0
    %673 = vmatprep.subr.mxu0 0.0
    %674 = vmatpush1.msra.mxu0 0.0
    %675 = vmatprep.subr.mxu0 0.0
    %676 = vmatpush1.msra.mxu0 0.0
    %677 = vmatprep.subr.mxu0 0.0
    %678 = vmatpush1.msra.mxu0 0.0
    %679 = vmatprep.subr.mxu0 0.0
    %680 = vmatpush1.msra.mxu0 0.0
    %681 = vmatprep.subr.mxu0 0.0
    %682 = vmatpush1.msra.mxu0 0.0
    %683 = vmatprep.subr.mxu0 0.0
    %684 = vmatpush1.msra.mxu0 0.0
    %685 = vmatprep.subr.mxu0 0.0
    %686 = vmatpush1.msra.mxu0 0.0
    %687 = vmatprep.mubr.f32.mxu0 0.0
    %688 = vmatmul.mubr.f32.gmra.mrb[0].mxu0 %v600
    %v689 = vpop.f32.mrb[0].mxu0
    %v690 = vadd.f32 0.0, %v689
    %v691 = vpop.f32.mrb[0].mxu0
    %692 = vmatprep.mubr.f32.mxu0 0.0
    %693 = vmatmul.mubr.f32.gmra.mrb[0].mxu0 %v603
    %v694 = vpop.f32.mrb[0].mxu0
    %v695 = vadd.f32 0.0, %v694
    %v696 = vpop.f32.mrb[0].mxu0
    %697 = vmatprep.mubr.f32.mxu0 0.0
    %698 = vmatmul.mubr.f32.gmra.mrb[0].mxu0 %v606
    %v699 = vpop.f32.mrb[0].mxu0
    %v700 = vadd.f32 0.0, %v699
    %v701 = vpop.f32.mrb[0].mxu0
    %702 = vmatprep.mubr.f32.mxu0 0.0
    %703 = vmatmul.mubr.f32.gmra.mrb[0].mxu0 %v609
    %v704 = vpop.f32.mrb[0].mxu0
    %v705 = vadd.f32 0.0, %v704
    %v706 = vpop.f32.mrb[0].mxu0
    %707 = vmatprep.mubr.f32.mxu0 0.0
    %708 = vmatmul.mubr.f32.gmra.mrb[0].mxu0 %v612
    %v709 = vpop.f32.mrb[0].mxu0
    %v710 = vadd.f32 0.0, %v709
    %v711 = vpop.f32.mrb[0].mxu0
    %712 = vmatprep.mubr.f32.mxu0 0.0
    %713 = vmatmul.mubr.f32.gmra.mrb[0].mxu0 %v615
    %v714 = vpop.f32.mrb[0].mxu0
    %v715 = vadd.f32 0.0, %v714
    %v716 = vpop.f32.mrb[0].mxu0
    %717 = vmatprep.mubr.f32.mxu0 0.0
    %718 = vmatmul.mubr.f32.gmra.mrb[0].mxu0 %v618
    %v719 = vpop.f32.mrb[0].mxu0
    %v720 = vadd.f32 0.0, %v719
    %v721 = vpop.f32.mrb[0].mxu0
    %722 = vmatprep.mubr.f32.mxu0 0.0
    %723 = vmatmul.mubr.f32.gmra.mrb[0].mxu0 %v621
    %v724 = vpop.f32.mrb[0].mxu0
    %v725 = vadd.f32 0.0, %v724
    %v726 = vpop.f32.mrb[0].mxu0
    %727 = vdwg.mxu0
    %v728 = vmul.f32 %v690, %v42
    %v729 = vmul.f32 %v695, %v43
    %v730 = vmul.f32 %v700, %v44
    %v731 = vmul.f32 %v705, %v45
    %v732 = vmul.f32 %v710, %v46
    %v733 = vmul.f32 %v715, %v47
    %v734 = vmul.f32 %v720, %v48
    %v735 = vmul.f32 %v725, %v49
    %v736 = vadd.f32 %v728, %v730
    %v737 = vadd.f32 %v729, %v731
    %v738 = vadd.f32 %v736, %v732
    %v739 = vadd.f32 %v737, %v733
    %v740 = vadd.f32 %v738, %v734
    %v741 = vadd.f32 %v739, %v735
    %v743 = vsel %vm104, %v740, 0
    %v746 = vsel %vm104, %v741, 0
    %748 = vmatprep.subr.mxu0 0.0
    %749 = vmatpush1.msra.mxu0 %v70
    %750 = vmatprep.subr.mxu0 0.0
    %751 = vmatpush1.msra.mxu0 %v71
    %752 = vmatprep.subr.mxu0 0.0
    %753 = vmatpush1.msra.mxu0 %v72
    %754 = vmatprep.subr.mxu0 0.0
    %755 = vmatpush1.msra.mxu0 %v73
    %756 = vmatprep.subr.mxu0 0.0
    %757 = vmatpush1.msra.mxu0 0.0
    %758 = vmatprep.subr.mxu0 0.0
    %759 = vmatpush1.msra.mxu0 0.0
    %760 = vmatprep.subr.mxu0 0.0
    %761 = vmatpush1.msra.mxu0 0.0
    %762 = vmatprep.subr.mxu0 0.0
    %763 = vmatpush1.msra.mxu0 0.0
    %764 = vmatprep.subr.mxu0 0.0
    %765 = vmatpush1.msra.mxu0 0.0
    %766 = vmatprep.subr.mxu0 0.0
    %767 = vmatpush1.msra.mxu0 0.0
    %768 = vmatprep.subr.mxu0 0.0
    %769 = vmatpush1.msra.mxu0 0.0
    %770 = vmatprep.subr.mxu0 0.0
    %771 = vmatpush1.msra.mxu0 0.0
    %772 = vmatprep.subr.mxu0 0.0
    %773 = vmatpush1.msra.mxu0 0.0
    %774 = vmatprep.subr.mxu0 0.0
    %775 = vmatpush1.msra.mxu0 0.0
    %776 = vmatprep.subr.mxu0 0.0
    %777 = vmatpush1.msra.mxu0 0.0
    %778 = vmatprep.subr.mxu0 0.0
    %779 = vmatpush1.msra.mxu0 0.0
    %780 = vmatprep.subr.mxu0 0.0
    %781 = vmatpush1.msra.mxu0 0.0
    %782 = vmatprep.subr.mxu0 0.0
    %783 = vmatpush1.msra.mxu0 0.0
    %784 = vmatprep.subr.mxu0 0.0
    %785 = vmatpush1.msra.mxu0 0.0
    %786 = vmatprep.subr.mxu0 0.0
    %787 = vmatpush1.msra.mxu0 0.0
    %788 = vmatprep.subr.mxu0 0.0
    %789 = vmatpush1.msra.mxu0 0.0
    %790 = vmatprep.subr.mxu0 0.0
    %791 = vmatpush1.msra.mxu0 0.0
    %792 = vmatprep.subr.mxu0 0.0
    %793 = vmatpush1.msra.mxu0 0.0
    %794 = vmatprep.subr.mxu0 0.0
    %795 = vmatpush1.msra.mxu0 0.0
    %796 = vmatprep.subr.mxu0 0.0
    %797 = vmatpush1.msra.mxu0 0.0
    %798 = vmatprep.subr.mxu0 0.0
    %799 = vmatpush1.msra.mxu0 0.0
    %800 = vmatprep.subr.mxu0 0.0
    %801 = vmatpush1.msra.mxu0 0.0
    %802 = vmatprep.subr.mxu0 0.0
    %803 = vmatpush1.msra.mxu0 0.0
    %804 = vmatprep.subr.mxu0 0.0
    %805 = vmatpush1.msra.mxu0 0.0
    %806 = vmatprep.subr.mxu0 0.0
    %807 = vmatpush1.msra.mxu0 0.0
    %808 = vmatprep.subr.mxu0 0.0
    %809 = vmatpush1.msra.mxu0 0.0
    %810 = vmatprep.subr.mxu0 0.0
    %811 = vmatpush1.msra.mxu0 0.0
    %812 = vmatprep.mubr.f32.mxu0 0.0
    %813 = vmatmul.mubr.f32.gmra.mrb[0].mxu0 %v743
    %v814 = vpop.f32.mrb[0].mxu0
    %v815 = vadd.f32 %v98, %v814
    %v816 = vpop.f32.mrb[0].mxu0
    %817 = vmatprep.mubr.f32.mxu0 0.0
    %818 = vmatmul.mubr.f32.gmra.mrb[0].mxu0 %v746
    %v819 = vpop.f32.mrb[0].mxu0
    %v820 = vadd.f32 %v99, %v819
    %v821 = vpop.f32.mrb[0].mxu0
    %822 = vdwg.mxu0
    %v823 = vadd.f32 %v815, %v40
    %v824 = vadd.f32 %v820, %v41
    %v825 = vsel %vm104, %v823, 0.0
    %826 = vadd.xlane.f32.xlu0 %v825
    %v827 = vpop.xlane.xlu0 %826
    %v828 = vsel %vm104, %v824, 0.0
    %829 = vadd.xlane.f32.xlu0 %v828
    %v830 = vpop.xlane.xlu0 %829
    %v831 = vmul.f32 %v827, %v111
    %v832 = vmul.f32 %v830, %v111
    %v833 = vsub.f32 %v823, %v831
    %v834 = vsub.f32 %v824, %v832
    %v835 = vmul.f32 %v833, %v833
    %v836 = vmul.f32 %v834, %v834
    %v837 = vsel %vm104, %v835, 0.0
    %838 = vadd.xlane.f32.xlu0 %v837
    %v839 = vpop.xlane.xlu0 %838
    %v840 = vsel %vm104, %v836, 0.0
    %841 = vadd.xlane.f32.xlu0 %v840
    %v842 = vpop.xlane.xlu0 %841
    %v843 = vmul.f32 %v839, %v111
    %v844 = vmul.f32 %v842, %v111
    %v845 = vadd.f32 %v843, 1e-06
    %v846 = vadd.f32 %v844, 1e-06
    %v847 = vrsqrt.pop %v845
    %v848 = vrsqrt.pop %v846
    %v849 = vmul.f32 %v833, %v847
    %v850 = vmul.f32 %v834, %v848
    %v851 = vmul.f32 %v849, %v90
    %v852 = vmul.f32 %v850, %v91
    %v853 = vadd.f32 %v851, %v92
    %v854 = vadd.f32 %v852, %v93
    %v856 = vsel %vm104, %v853, 0
    %v859 = vsel %vm104, %v854, 0
    %861 = vmatprep.subr.mxu0 0.0
    %862 = vmatpush1.msra.mxu0 %v74
    %863 = vmatprep.subr.mxu0 0.0
    %864 = vmatpush1.msra.mxu0 %v75
    %865 = vmatprep.subr.mxu0 0.0
    %866 = vmatpush1.msra.mxu0 %v76
    %867 = vmatprep.subr.mxu0 0.0
    %868 = vmatpush1.msra.mxu0 %v77
    %869 = vmatprep.subr.mxu0 0.0
    %870 = vmatpush1.msra.mxu0 0.0
    %871 = vmatprep.subr.mxu0 0.0
    %872 = vmatpush1.msra.mxu0 0.0
    %873 = vmatprep.subr.mxu0 0.0
    %874 = vmatpush1.msra.mxu0 0.0
    %875 = vmatprep.subr.mxu0 0.0
    %876 = vmatpush1.msra.mxu0 0.0
    %877 = vmatprep.subr.mxu0 0.0
    %878 = vmatpush1.msra.mxu0 0.0
    %879 = vmatprep.subr.mxu0 0.0
    %880 = vmatpush1.msra.mxu0 0.0
    %881 = vmatprep.subr.mxu0 0.0
    %882 = vmatpush1.msra.mxu0 0.0
    %883 = vmatprep.subr.mxu0 0.0
    %884 = vmatpush1.msra.mxu0 0.0
    %885 = vmatprep.subr.mxu0 0.0
    %886 = vmatpush1.msra.mxu0 0.0
    %887 = vmatprep.subr.mxu0 0.0
    %888 = vmatpush1.msra.mxu0 0.0
    %889 = vmatprep.subr.mxu0 0.0
    %890 = vmatpush1.msra.mxu0 0.0
    %891 = vmatprep.subr.mxu0 0.0
    %892 = vmatpush1.msra.mxu0 0.0
    %893 = vmatprep.subr.mxu0 0.0
    %894 = vmatpush1.msra.mxu0 0.0
    %895 = vmatprep.subr.mxu0 0.0
    %896 = vmatpush1.msra.mxu0 0.0
    %897 = vmatprep.subr.mxu0 0.0
    %898 = vmatpush1.msra.mxu0 0.0
    %899 = vmatprep.subr.mxu0 0.0
    %900 = vmatpush1.msra.mxu0 0.0
    %901 = vmatprep.subr.mxu0 0.0
    %902 = vmatpush1.msra.mxu0 0.0
    %903 = vmatprep.subr.mxu0 0.0
    %904 = vmatpush1.msra.mxu0 0.0
    %905 = vmatprep.subr.mxu0 0.0
    %906 = vmatpush1.msra.mxu0 0.0
    %907 = vmatprep.subr.mxu0 0.0
    %908 = vmatpush1.msra.mxu0 0.0
    %909 = vmatprep.subr.mxu0 0.0
    %910 = vmatpush1.msra.mxu0 0.0
    %911 = vmatprep.subr.mxu0 0.0
    %912 = vmatpush1.msra.mxu0 0.0
    %913 = vmatprep.subr.mxu0 0.0
    %914 = vmatpush1.msra.mxu0 0.0
    %915 = vmatprep.subr.mxu0 0.0
    %916 = vmatpush1.msra.mxu0 0.0
    %917 = vmatprep.subr.mxu0 0.0
    %918 = vmatpush1.msra.mxu0 0.0
    %919 = vmatprep.subr.mxu0 0.0
    %920 = vmatpush1.msra.mxu0 0.0
    %921 = vmatprep.subr.mxu0 0.0
    %922 = vmatpush1.msra.mxu0 0.0
    %923 = vmatprep.subr.mxu0 0.0
    %924 = vmatpush1.msra.mxu0 0.0
    %925 = vmatprep.mubr.f32.mxu0 0.0
    %926 = vmatmul.mubr.f32.gmra.mrb[0].mxu0 %v856
    %v927 = vpop.f32.mrb[0].mxu0
    %v928 = vadd.f32 %v102, %v927
    %v929 = vpop.f32.mrb[0].mxu0
    %930 = vmatprep.mubr.f32.mxu0 0.0
    %931 = vmatmul.mubr.f32.gmra.mrb[0].mxu0 %v859
    %v932 = vpop.f32.mrb[0].mxu0
    %v933 = vadd.f32 %v103, %v932
    %v934 = vpop.f32.mrb[0].mxu0
    %935 = vdwg.mxu0
    %v936 = vmul.f32 %v928, 0.5
    %v937 = vmul.f32 %v933, 0.5
    %v938 = vmul.f32 %v928, 0.70710677
    %v939 = vmul.f32 %v933, 0.70710677
    %v940 = verf.f32.pop %v938
    %v941 = verf.f32.pop %v939
    %v942 = vadd.f32 %v940, 1.0
    %v943 = vadd.f32 %v941, 1.0
    %v944 = vmul.f32 %v936, %v942
    %v945 = vmul.f32 %v937, %v943
    %vm946 = vcmask 523264
    %v948 = vsel %vm946, %v944, 0
    %v951 = vsel %vm946, %v945, 0
    %953 = vmatprep.subr.mxu0 0.0
    %954 = vmatpush1.msra.mxu0 %v78
    %955 = vmatprep.subr.mxu0 0.0
    %956 = vmatpush1.msra.mxu0 %v79
    %957 = vmatprep.subr.mxu0 0.0
    %958 = vmatpush1.msra.mxu0 %v80
    %959 = vmatprep.subr.mxu0 0.0
    %960 = vmatpush1.msra.mxu0 %v81
    %961 = vmatprep.subr.mxu0 0.0
    %962 = vmatpush1.msra.mxu0 %v82
    %963 = vmatprep.subr.mxu0 0.0
    %964 = vmatpush1.msra.mxu0 %v83
    %965 = vmatprep.subr.mxu0 0.0
    %966 = vmatpush1.msra.mxu0 %v84
    %967 = vmatprep.subr.mxu0 0.0
    %968 = vmatpush1.msra.mxu0 %v85
    %969 = vmatprep.subr.mxu0 0.0
    %970 = vmatpush1.msra.mxu0 0.0
    %971 = vmatprep.subr.mxu0 0.0
    %972 = vmatpush1.msra.mxu0 0.0
    %973 = vmatprep.subr.mxu0 0.0
    %974 = vmatpush1.msra.mxu0 0.0
    %975 = vmatprep.subr.mxu0 0.0
    %976 = vmatpush1.msra.mxu0 0.0
    %977 = vmatprep.subr.mxu0 0.0
    %978 = vmatpush1.msra.mxu0 0.0
    %979 = vmatprep.subr.mxu0 0.0
    %980 = vmatpush1.msra.mxu0 0.0
    %981 = vmatprep.subr.mxu0 0.0
    %982 = vmatpush1.msra.mxu0 0.0
    %983 = vmatprep.subr.mxu0 0.0
    %984 = vmatpush1.msra.mxu0 0.0
    %985 = vmatprep.subr.mxu0 0.0
    %986 = vmatpush1.msra.mxu0 0.0
    %987 = vmatprep.subr.mxu0 0.0
    %988 = vmatpush1.msra.mxu0 0.0
    %989 = vmatprep.subr.mxu0 0.0
    %990 = vmatpush1.msra.mxu0 0.0
    %991 = vmatprep.subr.mxu0 0.0
    %992 = vmatpush1.msra.mxu0 0.0
    %993 = vmatprep.subr.mxu0 0.0
    %994 = vmatpush1.msra.mxu0 0.0
    %995 = vmatprep.subr.mxu0 0.0
    %996 = vmatpush1.msra.mxu0 0.0
    %997 = vmatprep.subr.mxu0 0.0
    %998 = vmatpush1.msra.mxu0 0.0
    %999 = vmatprep.subr.mxu0 0.0
    %1000 = vmatpush1.msra.mxu0 0.0
    %1001 = vmatprep.subr.mxu0 0.0
    %1002 = vmatpush1.msra.mxu0 0.0
    %1003 = vmatprep.subr.mxu0 0.0
    %1004 = vmatpush1.msra.mxu0 0.0
    %1005 = vmatprep.subr.mxu0 0.0
    %1006 = vmatpush1.msra.mxu0 0.0
    %1007 = vmatprep.subr.mxu0 0.0
    %1008 = vmatpush1.msra.mxu0 0.0
    %1009 = vmatprep.subr.mxu0 0.0
    %1010 = vmatpush1.msra.mxu0 0.0
    %1011 = vmatprep.subr.mxu0 0.0
    %1012 = vmatpush1.msra.mxu0 0.0
    %1013 = vmatprep.subr.mxu0 0.0
    %1014 = vmatpush1.msra.mxu0 0.0
    %1015 = vmatprep.subr.mxu0 0.0
    %1016 = vmatpush1.msra.mxu0 0.0
    %1017 = vmatprep.mubr.f32.mxu0 0.0
    %1018 = vmatmul.mubr.f32.gmra.mrb[0].mxu0 %v948
    %v1019 = vpop.f32.mrb[0].mxu0
    %v1020 = vadd.f32 %v100, %v1019
    %v1021 = vpop.f32.mrb[0].mxu0
    %1022 = vmatprep.mubr.f32.mxu0 0.0
    %1023 = vmatmul.mubr.f32.gmra.mrb[0].mxu0 %v951
    %v1024 = vpop.f32.mrb[0].mxu0
    %v1025 = vadd.f32 %v101, %v1024
    %v1026 = vpop.f32.mrb[0].mxu0
    %1027 = vdwg.mxu0
    %v1028 = vadd.f32 %v823, %v1020
    %v1029 = vadd.f32 %v824, %v1025
    %1030 = vst.msk [vmem:[#allocation7] sm:$0xff] %vm104, %v1028
    %1031 = vst.msk [vmem:[#allocation7 + $0x8] sm:$0xff] %vm104, %v1029
    // Predicated region
    $region18: #{tpu_custom_call.1} parent=1 // pred_check
      _
    $region19: #{tpu_custom_call.1} parent=1 // pred_check_branch
      %1033 = sbr.rel (0) target = $region21
    $region20: #{tpu_custom_call.1} parent=1 // pred_region
      %s1035 = ssub.s32 256, 256
      %1036 = vsyncadd [#allocation4], %s1035
      %s1037 = sshll.u32 [#allocation7], 4
      %s1038 = int_to_ptr.vmem [resolvable:$true] %s1037
      %1043 = dma.vmem_to_hbm [thread:$0]  %s1038, 256, %s2, [#allocation4], 128, 128, 8
    $region21: #{tpu_custom_call.1} parent=1 // pred_fallthru
      _
    // Predicated region
    $region22: #{tpu_custom_call.1} parent=1 // pred_check
      _
    $region23: #{tpu_custom_call.1} parent=1 // pred_check_branch
      %1045 = sbr.rel (0) target = $region25
    $region24: #{tpu_custom_call.1} parent=1 // pred_region
      %1046 = dma.done [#allocation4], 256
    $region25: #{tpu_custom_call.1} parent=1 // pred_fallthru
      _
    %1047 = vsyncpa [#allocation3], 1
    %1048 = vsyncpa [#allocation6], 1
    %1049 = vsyncpa [#allocation4], 1

</llo_original>
